<compile_context>
chip_gen: v7x
topology: tpu7x:2x2x1
jax: 0.10.0
libtpu: 0.0.40
codegen_flags: <defaults>
</compile_context>

<pallas_src>
import functools

import numpy as np
import jax
import jax.numpy as jnp
from jax.experimental import pallas as pl
from jax.experimental.pallas import tpu as pltpu


def _round_up(x, m):
    return (x + m - 1) // m * m


def _contrastive_tile_kernel(im_ref, st_ref, out_ref, *, n_ex, tile_m, m_actual,
                             inv_temp, use_bf16):
    """One M-tile of the contrastive loss.

    im_ref : (TM, Dp) f32 VMEM  -- raw (un-normalized) image rows, zero-padded.
    st_ref : (Dp, N)  f32 VMEM  -- L2-normalized hints, transposed (resident block).
    out_ref: (1, 8, 128) f32    -- lanes 0..3 = [sum_lse, sum_pos, sum_scores, sum_correct].
    """
    i = pl.program_id(0)

    im = im_ref[...]                                   # (TM, Dp)
    st = st_ref[...]                                   # (Dp, N)

    # --- normalize rows; fold 1/temperature into the per-row scale (one rsqrt) ---
    sumsq = jnp.sum(im * im, axis=-1, keepdims=True)               # (TM, 1)
    scale = jax.lax.rsqrt(jnp.maximum(sumsq, 1e-24)) * jnp.float32(inv_temp)
    im_n = im * scale                                              # (TM, Dp)

    # --- cosine scores / temperature: single canonical (TM,Dp)@(Dp,N) MXU matmul ---
    if use_bf16:
        scores = jnp.dot(im_n.astype(jnp.bfloat16), st.astype(jnp.bfloat16),
                         preferred_element_type=jnp.float32)       # (TM, N)
    else:
        scores = jnp.dot(im_n, st, preferred_element_type=jnp.float32)

    N = scores.shape[1]

    # --- block-diagonal positive mask from global row ids (built in-kernel) ---
    row_g = jax.lax.broadcasted_iota(jnp.int32, (tile_m, N), 0) + i * tile_m
    col = jax.lax.broadcasted_iota(jnp.int32, (tile_m, N), 1)
    pos_mask = jnp.logical_and(row_g >= col * n_ex, row_g < (col + 1) * n_ex)

    pos = jnp.sum(jnp.where(pos_mask, scores, 0.0), axis=1, keepdims=True)   # (TM, 1)
    max_neg = jnp.max(jnp.where(pos_mask, -1e30, scores), axis=1, keepdims=True)
    row_sum = jnp.sum(scores, axis=1, keepdims=True)

    # row max derived from already-computed reductions (saves one full XLU max pass)
    row_max = jnp.maximum(max_neg, pos)
    lse = row_max + jnp.log(jnp.sum(jnp.exp(scores - row_max), axis=1, keepdims=True))

    # --- mask out padded rows, reduce to per-tile scalar partials ---
    grow = jax.lax.broadcasted_iota(jnp.int32, (tile_m, 1), 0) + i * tile_m
    valid = (grow < m_actual).astype(jnp.float32)                  # (TM, 1)

    p_lse = jnp.sum(valid * lse)
    p_pos = jnp.sum(valid * pos)
    p_sum = jnp.sum(valid * row_sum)
    p_acc = jnp.sum(valid * (pos >= max_neg).astype(jnp.float32))

    # --- lane-dense partials: (1, 8, 128) block, lanes 0..3 carry the partial sums ---
    lane = jax.lax.broadcasted_iota(jnp.int32, (1, 8, 128), 2)
    vals = jnp.where(lane == 0, p_lse,
           jnp.where(lane == 1, p_pos,
           jnp.where(lane == 2, p_sum,
           jnp.where(lane == 3, p_acc, 0.0))))
    out_ref[...] = vals


def contrastive_loss_forward(im, s, temperature=0.1, tile_m=256, use_bf16_matmul=False):
    """Pallas implementation of ContrastiveLoss.forward.

    im: (N, n_ex, D) float32, s: (N, D) float32.
    Returns (loss scalar, metric dict with pos_score / neg_score / part_acc).
    """
    N, n_ex, D = im.shape
    M = N * n_ex

    # --- tile / padding geometry (M -> multiple of tile_m, D -> multiple of 128) ---
    tm = max(8, (int(tile_m) // 8) * 8)
    tm = min(tm, _round_up(M, 8))
    Mp = _round_up(M, tm)
    Dp = _round_up(D, 128)
    num_tiles = Mp // tm

    im_flat = im.reshape(M, D)
    if Mp > M or Dp > D:
        im_flat = jnp.pad(im_flat, ((0, Mp - M), (0, Dp - D)))

    # Hoisted out of the per-tile path: normalize the hints once and present the
    # matmul RHS in canonical (D, N) form (zero-padding D is semantics-preserving).
    s_ss = jnp.sum(s * s, axis=-1, keepdims=True)
    s_n = s * jax.lax.rsqrt(jnp.maximum(s_ss, 1e-24))              # == F.normalize(s)
    if Dp > D:
        s_n = jnp.pad(s_n, ((0, 0), (0, Dp - D)))
    s_t = s_n.T                                                    # (Dp, N)

    # VMEM budget: double-buffered im tile + resident s + scores/temporaries.
    est_bytes = 4 * (3 * tm * Dp + 2 * Dp * N + 8 * tm * N + 4 * 8 * 128)
    vmem_limit = int(min(64 * 2**20, max(32 * 2**20, 2 * est_bytes)))

    kernel = functools.partial(
        _contrastive_tile_kernel,
        n_ex=n_ex, tile_m=tm, m_actual=M,
        inv_temp=1.0 / temperature, use_bf16=use_bf16_matmul,
    )

    # TODO(synk): for very large N (hint count), also tile the N/column axis and pad it
    # to a multiple of 128 with -inf column masking; at typical sizes s stays resident.
    partials = pl.pallas_call(
        kernel,
        out_shape=jax.ShapeDtypeStruct((num_tiles, 8, 128), jnp.float32),
        grid=(num_tiles,),
        in_specs=[
            pl.BlockSpec((tm, Dp), lambda i: (i, 0)),   # im tile (pipelined)
            pl.BlockSpec((Dp, N), lambda i: (0, 0)),    # normalized hints (resident)
        ],
        out_specs=pl.BlockSpec((1, 8, 128), lambda i: (i, 0, 0)),
        compiler_params=pltpu.CompilerParams(
            dimension_semantics=("parallel",),
            vmem_limit_bytes=vmem_limit,
        ),
    )(im_flat, s_t)

    # Tiny cross-tile reduce + finalize in the wrapper (keeps the grid axis parallel).
    totals = jnp.sum(partials[:, 0, :], axis=0)                    # (128,)
    t_lse, t_pos, t_sum, t_acc = totals[0], totals[1], totals[2], totals[3]

    m_f = jnp.float32(M)
    loss = (t_lse - t_pos) / m_f
    metric = {
        "pos_score": t_pos / m_f,
        # NOTE: N == 1 is degenerate (divide by zero), same as the PyTorch reference
        # where negative_scores is empty and .mean() is NaN.
        "neg_score": (t_sum - t_pos) / (m_f * jnp.float32(N - 1)),
        "part_acc": t_acc / m_f,
    }
    return loss, metric


def reference_forward_np(im, s, temperature=0.1):
    """NumPy reference mirroring the PyTorch forward literally (for validation)."""
    im = np.asarray(im, np.float64)
    s = np.asarray(s, np.float64)
    N, n_ex, D = im.shape
    M = N * n_ex
    im_n = im / np.maximum(np.linalg.norm(im, axis=-1, keepdims=True), 1e-12)
    s_n = s / np.maximum(np.linalg.norm(s, axis=-1, keepdims=True), 1e-12)
    scores = im_n.reshape(M, D) @ s_n.T / temperature              # (M, N)

    mask = np.zeros((M, N), dtype=bool)                            # block_diag of ones(n_ex,1)
    for i in range(N):
        mask[i * n_ex:(i + 1) * n_ex, i] = True
    pos = scores[mask]                                             # (M,)
    neg = scores[~mask].reshape(M, N - 1)                          # (M, N-1)
    all_scores = np.concatenate([pos[:, None], neg], axis=1)       # (M, N)

    z = all_scores - all_scores.max(axis=1, keepdims=True)
    log_softmax = z - np.log(np.exp(z).sum(axis=1, keepdims=True))
    loss = -log_softmax[:, 0].mean()
    metric = {
        "pos_score": pos.mean(),
        "neg_score": neg.mean(),
        "part_acc": (np.argmax(all_scores, axis=1) == 0).mean(),
    }
    return loss, metric


if __name__ == "__main__":
    key = jax.random.PRNGKey(0)
    N, n_ex, D = 8, 4, 32
    k_im, k_s = jax.random.split(key)
    im = jax.random.normal(k_im, (N, n_ex, D), jnp.float32)
    s = jax.random.normal(k_s, (N, D), jnp.float32)

    # f32 MXU path (exact), tiny tile to exercise the M-grid (4 tiles of 8 rows).
    loss, metric = contrastive_loss_forward(im, s, temperature=0.1, tile_m=8)
    loss, metric = jax.block_until_ready((loss, metric))

    ref_loss, ref_metric = reference_forward_np(im, s, temperature=0.1)

    assert np.allclose(float(loss), ref_loss, atol=1e-4, rtol=1e-4), (float(loss), ref_loss)
    for k in ("pos_score", "neg_score", "part_acc"):
        assert np.allclose(float(metric[k]), ref_metric[k], atol=1e-4, rtol=1e-4), (
            k, float(metric[k]), ref_metric[k])

    # bf16-operand MXU path (v6e/v7x throughput optimization): looser tolerance.
    loss_bf16, metric_bf16 = contrastive_loss_forward(
        im, s, temperature=0.1, tile_m=8, use_bf16_matmul=True)
    loss_bf16, metric_bf16 = jax.block_until_ready((loss_bf16, metric_bf16))
    assert np.allclose(float(loss_bf16), ref_loss, atol=0.2, rtol=0.1), (
        float(loss_bf16), ref_loss)

    print("KERNEL_OK")
</pallas_src>

<mosaic_0001>
module attributes {stable_mosaic.version = 11 : i64} {
  func.func @_contrastive_tile_kernel(%arg0: i32, %arg1: memref<8x128xf32, #tpu.memory_space<vmem>>, %arg2: memref<128x8xf32, #tpu.memory_space<vmem>>, %arg3: memref<1x8x128xf32, #tpu.memory_space<vmem>>) attributes {dimension_semantics = [#tpu.dimension_semantics<parallel>], iteration_bounds = array<i64: 4>, scalar_prefetch = 0 : i64, scratch_operands = 0 : i64, tpu.core_type = #tpu.core_type<tc>, window_params = [{transform_indices = @transform_0, window_bounds = array<i64: 8, 128>}, {pipeline_mode = #tpu.pipeline_mode<synchronous>, transform_indices = @transform_1, window_bounds = array<i64: 128, 8>}, {transform_indices = @transform_2, window_bounds = array<i64: 1, 8, 128>}]} {
    %c0 = arith.constant 0 : index
    %c0_0 = arith.constant 0 : index
    %0 = vector.load %arg1[%c0, %c0_0] : memref<8x128xf32, #tpu.memory_space<vmem>>, vector<8x128xf32>
    %c0_1 = arith.constant 0 : index
    %c0_2 = arith.constant 0 : index
    %1 = vector.load %arg2[%c0_1, %c0_2] : memref<128x8xf32, #tpu.memory_space<vmem>>, vector<128x8xf32>
    %2 = arith.mulf %0, %0 : vector<8x128xf32>
    %cst = arith.constant dense<0.000000e+00> : vector<8xf32>
    %3 = vector.multi_reduction <add>, %2, %cst [1] : vector<8x128xf32> to vector<8xf32>
    %4 = vector.shape_cast %3 : vector<8xf32> to vector<8x1xf32>
    %cst_3 = arith.constant 1.000000e-24 : f32
    %5 = vector.broadcast %cst_3 : f32 to vector<8x1xf32>
    %6 = arith.maximumf %4, %5 : vector<8x1xf32>
    %7 = math.rsqrt %6 : vector<8x1xf32>
    %cst_4 = arith.constant 1.000000e+01 : f32
    %8 = vector.broadcast %cst_4 : f32 to vector<8x1xf32>
    %9 = arith.mulf %7, %8 : vector<8x1xf32>
    %10 = vector.broadcast %9 : vector<8x1xf32> to vector<8x128xf32>
    %11 = arith.mulf %0, %10 : vector<8x128xf32>
    %cst_5 = arith.constant dense<0.000000e+00> : vector<8x8xf32>
    %12 = tpu.matmul %11, %1, %cst_5 {dimension_numbers = #tpu.dot_dimension_numbers<[1], [0], [0], [1], [0, 0, 1, 1], [], []>} : vector<8x128xf32>, vector<128x8xf32>, vector<8x8xf32> -> vector<8x8xf32>
    %13 = tpu.iota {dimensions = array<i32: 0>} : vector<8x8xi32>
    %c8_i32 = arith.constant 8 : i32
    %14 = arith.muli %arg0, %c8_i32 : i32
    %15 = vector.broadcast %14 : i32 to vector<8x8xi32>
    %16 = arith.addi %13, %15 : vector<8x8xi32>
    %17 = tpu.iota {dimensions = array<i32: 1>} : vector<8x8xi32>
    %c4_i32 = arith.constant 4 : i32
    %18 = vector.broadcast %c4_i32 : i32 to vector<8x8xi32>
    %19 = arith.muli %17, %18 : vector<8x8xi32>
    %20 = arith.cmpi sge, %16, %19 : vector<8x8xi32>
    %c1_i32 = arith.constant 1 : i32
    %21 = vector.broadcast %c1_i32 : i32 to vector<8x8xi32>
    %22 = arith.addi %17, %21 : vector<8x8xi32>
    %c4_i32_6 = arith.constant 4 : i32
    %23 = vector.broadcast %c4_i32_6 : i32 to vector<8x8xi32>
    %24 = arith.muli %22, %23 : vector<8x8xi32>
    %25 = arith.cmpi slt, %16, %24 : vector<8x8xi32>
    %26 = arith.andi %20, %25 : vector<8x8xi1>
    %cst_7 = arith.constant 0.000000e+00 : f32
    %27 = vector.broadcast %cst_7 : f32 to vector<8x8xf32>
    %28 = arith.select %26, %12, %27 : vector<8x8xi1>, vector<8x8xf32>
    %cst_8 = arith.constant dense<0.000000e+00> : vector<8xf32>
    %29 = vector.multi_reduction <add>, %28, %cst_8 [1] : vector<8x8xf32> to vector<8xf32>
    %30 = vector.shape_cast %29 : vector<8xf32> to vector<8x1xf32>
    %cst_9 = arith.constant -1.000000e+30 : f32
    %31 = vector.broadcast %cst_9 : f32 to vector<8x8xf32>
    %32 = arith.select %26, %31, %12 : vector<8x8xi1>, vector<8x8xf32>
    %cst_10 = arith.constant dense<0xFF800000> : vector<8xf32>
    %33 = vector.multi_reduction <maximumf>, %32, %cst_10 [1] : vector<8x8xf32> to vector<8xf32>
    %34 = vector.shape_cast %33 : vector<8xf32> to vector<8x1xf32>
    %cst_11 = arith.constant dense<0.000000e+00> : vector<8xf32>
    %35 = vector.multi_reduction <add>, %12, %cst_11 [1] : vector<8x8xf32> to vector<8xf32>
    %36 = vector.shape_cast %35 : vector<8xf32> to vector<8x1xf32>
    %37 = arith.maximumf %34, %30 : vector<8x1xf32>
    %38 = vector.broadcast %37 : vector<8x1xf32> to vector<8x8xf32>
    %39 = arith.subf %12, %38 : vector<8x8xf32>
    %40 = math.exp %39 : vector<8x8xf32>
    %cst_12 = arith.constant dense<0.000000e+00> : vector<8xf32>
    %41 = vector.multi_reduction <add>, %40, %cst_12 [1] : vector<8x8xf32> to vector<8xf32>
    %42 = vector.shape_cast %41 : vector<8xf32> to vector<8x1xf32>
    %43 = math.log %42 : vector<8x1xf32>
    %44 = arith.addf %37, %43 : vector<8x1xf32>
    %45 = tpu.iota {dimensions = array<i32: 0>} : vector<8x1xi32>
    %c8_i32_13 = arith.constant 8 : i32
    %46 = arith.muli %arg0, %c8_i32_13 : i32
    %47 = vector.broadcast %46 : i32 to vector<8x1xi32>
    %48 = arith.addi %45, %47 : vector<8x1xi32>
    %c32_i32 = arith.constant 32 : i32
    %49 = vector.broadcast %c32_i32 : i32 to vector<8x1xi32>
    %50 = arith.cmpi slt, %48, %49 : vector<8x1xi32>
    %51 = arith.extui %50 : vector<8x1xi1> to vector<8x1xi32>
    %52 = arith.sitofp %51 : vector<8x1xi32> to vector<8x1xf32>
    %53 = arith.mulf %52, %44 : vector<8x1xf32>
    %54 = vector.shape_cast %53 : vector<8x1xf32> to vector<1x8x1xf32>
    %cst_14 = arith.constant dense<0.000000e+00> : vector<1xf32>
    %55 = vector.multi_reduction <add>, %54, %cst_14 [1, 2] : vector<1x8x1xf32> to vector<1xf32>
    %56 = vector.shape_cast %55 : vector<1xf32> to vector<1x1x1xf32>
    %57 = vector.extract %56[0, 0, 0] : f32 from vector<1x1x1xf32>
    %58 = arith.mulf %52, %30 : vector<8x1xf32>
    %59 = vector.shape_cast %58 : vector<8x1xf32> to vector<1x8x1xf32>
    %cst_15 = arith.constant dense<0.000000e+00> : vector<1xf32>
    %60 = vector.multi_reduction <add>, %59, %cst_15 [1, 2] : vector<1x8x1xf32> to vector<1xf32>
    %61 = vector.shape_cast %60 : vector<1xf32> to vector<1x1x1xf32>
    %62 = vector.extract %61[0, 0, 0] : f32 from vector<1x1x1xf32>
    %63 = arith.mulf %52, %36 : vector<8x1xf32>
    %64 = vector.shape_cast %63 : vector<8x1xf32> to vector<1x8x1xf32>
    %cst_16 = arith.constant dense<0.000000e+00> : vector<1xf32>
    %65 = vector.multi_reduction <add>, %64, %cst_16 [1, 2] : vector<1x8x1xf32> to vector<1xf32>
    %66 = vector.shape_cast %65 : vector<1xf32> to vector<1x1x1xf32>
    %67 = vector.extract %66[0, 0, 0] : f32 from vector<1x1x1xf32>
    %68 = arith.cmpf oge, %30, %34 : vector<8x1xf32>
    %69 = arith.extui %68 : vector<8x1xi1> to vector<8x1xi32>
    %70 = arith.sitofp %69 : vector<8x1xi32> to vector<8x1xf32>
    %71 = arith.mulf %52, %70 : vector<8x1xf32>
    %72 = vector.shape_cast %71 : vector<8x1xf32> to vector<1x8x1xf32>
    %cst_17 = arith.constant dense<0.000000e+00> : vector<1xf32>
    %73 = vector.multi_reduction <add>, %72, %cst_17 [1, 2] : vector<1x8x1xf32> to vector<1xf32>
    %74 = vector.shape_cast %73 : vector<1xf32> to vector<1x1x1xf32>
    %75 = vector.extract %74[0, 0, 0] : f32 from vector<1x1x1xf32>
    %76 = tpu.iota {dimensions = array<i32: 2>} : vector<1x8x128xi32>
    %c0_i32 = arith.constant 0 : i32
    %77 = vector.broadcast %c0_i32 : i32 to vector<1x8x128xi32>
    %78 = arith.cmpi eq, %76, %77 : vector<1x8x128xi32>
    %c1_i32_18 = arith.constant 1 : i32
    %79 = vector.broadcast %c1_i32_18 : i32 to vector<1x8x128xi32>
    %80 = arith.cmpi eq, %76, %79 : vector<1x8x128xi32>
    %c2_i32 = arith.constant 2 : i32
    %81 = vector.broadcast %c2_i32 : i32 to vector<1x8x128xi32>
    %82 = arith.cmpi eq, %76, %81 : vector<1x8x128xi32>
    %c3_i32 = arith.constant 3 : i32
    %83 = vector.broadcast %c3_i32 : i32 to vector<1x8x128xi32>
    %84 = arith.cmpi eq, %76, %83 : vector<1x8x128xi32>
    %cst_19 = arith.constant 0.000000e+00 : f32
    %85 = vector.broadcast %75 : f32 to vector<1x8x128xf32>
    %86 = vector.broadcast %cst_19 : f32 to vector<1x8x128xf32>
    %87 = arith.select %84, %85, %86 : vector<1x8x128xi1>, vector<1x8x128xf32>
    %88 = vector.broadcast %67 : f32 to vector<1x8x128xf32>
    %89 = arith.select %82, %88, %87 : vector<1x8x128xi1>, vector<1x8x128xf32>
    %90 = vector.broadcast %62 : f32 to vector<1x8x128xf32>
    %91 = arith.select %80, %90, %89 : vector<1x8x128xi1>, vector<1x8x128xf32>
    %92 = vector.broadcast %57 : f32 to vector<1x8x128xf32>
    %93 = arith.select %78, %92, %91 : vector<1x8x128xi1>, vector<1x8x128xf32>
    %c0_20 = arith.constant 0 : index
    %c0_21 = arith.constant 0 : index
    %c0_22 = arith.constant 0 : index
    %94 = vector.load %arg3[%c0_20, %c0_21, %c0_22] : memref<1x8x128xf32, #tpu.memory_space<vmem>>, vector<1x8x128xf32>
    tpu.vector_store %arg3[%c0_20, %c0_21, %c0_22], %93 {strides = array<i32>} : memref<1x8x128xf32, #tpu.memory_space<vmem>>, vector<1x8x128xf32>,
    return
  }
  func.func @transform_0(%arg0: i32) -> (i32, i32) {
    %c0_i32 = arith.constant 0 : i32
    %c0_i32_0 = arith.constant 0 : i32
    return %arg0, %c0_i32 : i32, i32
  }
  func.func @transform_1(%arg0: i32) -> (i32, i32) {
    %c0_i32 = arith.constant 0 : i32
    %c0_i32_0 = arith.constant 0 : i32
    %c0_i32_1 = arith.constant 0 : i32
    return %c0_i32, %c0_i32_0 : i32, i32
  }
  func.func @transform_2(%arg0: i32) -> (i32, i32, i32) {
    %c0_i32 = arith.constant 0 : i32
    %c0_i32_0 = arith.constant 0 : i32
    %c0_i32_1 = arith.constant 0 : i32
    return %arg0, %c0_i32, %c0_i32_0 : i32, i32, i32
  }
}

</mosaic_0001>

<llo_original>
// kernel: tpu_custom_call.1
$region0: #{tpu_custom_call.1}
  #allocation0 [shape = 'u32[]', space=smem, size = 0x4, offset = 0x4, fixed_abs, tag = 'smem constant byte address 0x4 - core index']
  #allocation1 [shape = 'u32[144,128]{1,0:T(1,128)}', space=vmem, size = 0x12000, scoped, tag = 'internal scratch']
  %s0 = inlined_call_operand.vmem [shape: f32[32,128], index: 0, kind: input, shape index: {}]
  %s1 = inlined_call_operand.vmem [shape: f32[128,8], index: 1, kind: input, shape index: {}]
  %s2 = inlined_call_operand.hbm [shape: f32[4,8,128], index: 2, kind: output, shape index: {}]
  %s3 = sld [smem:[#allocation0]]
  $region41: #{tpu_custom_call.1} parent=0
    _
  %s5 = ssub.s32 1, %s3
  %s6 = scalar_select 0, %s5, %s3
  $region1: #{tpu_custom_call.1} parent=0
    #allocation2 [shape = 'u8[8192]{0}', space=vmem, size = 0x2000, scoped, tag = 'output window, operand 0']
    #allocation3 [shape = 's32[2]{0}', space=sflag, size = 0x8, scoped, tag = 'scoped memory for tpu_custom_call.1']
    %7 = vsyncpa [#allocation3], 0
    %s8 = scalar_lea.sflag [#allocation3], 1
    %9 = vsyncpa %s8, 0
    loop: start=0, step=1, limit=6
    $region2: #{tpu_custom_call.1} parent=1 // loop_pre_header
      _
    $region3: #{tpu_custom_call.1} parent=1 // loop_header
      %s11 = sphi 0, %s15
      %p12 = scmp.ge.s32.totalorder %s11, 6
      %s21 = sphi 0, %s23
      %s24 = sphi 0, %s21
      %s25 = sphi 0, %s24
      %s41 = sphi 0, %s25
      %s45 = sphi 0, %s45
      %s47 = sphi 0, %s45
      %s48 = sphi 0, %s47
      %s62 = sphi 0, %s48
      %s68 = sphi 0, %s70
      %s71 = sphi 0, %s68
      %s72 = sphi 0, %s71
      %s88 = sphi 0, %s72
    $region4: #{tpu_custom_call.1} parent=1 // loop_header_branch
      %14 = sbr.rel (%p12) target = $region8
    $region5: #{tpu_custom_call.1} parent=1 // loop_body
      %s16 = ssub.s32 %s11, 1
      %s17 = ssub.s32 %s11, 2
      %s18 = sadd.s32 %s11, 1
      %s19 = ssub.s32 %s11, %s18
      %p20 = scmp.eq.s32.totalorder %s19, 0
      %s22 = sadd.s32 %s21, 1
      %s23 = scalar_select %p20, %s21, %s22
      %p26 = pneg %p20
      %p27 = scmp.eq.s32.totalorder %s11, 3
      %p28 = por %p26, %p27
      %p29 = scmp.ne.s32.totalorder %s21, %s24
      %p30 = scmp.eq.s32.totalorder %s11, 0
      %p31 = por %p29, %p30
      %p32 = scmp.ne.s32.totalorder %s21, %s24
      %p33 = scmp.eq.s32.totalorder %s16, 3
      %p34 = por %p32, %p33
      %p35 = scmp.ne.s32.totalorder %s24, %s25
      %p36 = scmp.eq.s32.totalorder %s16, 0
      %p37 = por %p35, %p36
      %p38 = scmp.ne.s32.totalorder %s24, %s25
      %p39 = scmp.eq.s32.totalorder %s17, 3
      %p40 = por %p38, %p39
      %p42 = scmp.ne.s32.totalorder %s25, %s41
      %p43 = scmp.eq.s32.totalorder %s17, 0
      %p44 = por %p42, %p43
      %s46 = sadd.s32 %s45, 1
      %p49 = scmp.eq.s32.totalorder %s11, 3
      %p50 = scmp.ne.s32.totalorder %s45, %s47
      %p51 = scmp.eq.s32.totalorder %s11, 0
      %p52 = por %p50, %p51
      %p53 = scmp.ne.s32.totalorder %s45, %s47
      %p54 = scmp.eq.s32.totalorder %s16, 3
      %p55 = por %p53, %p54
      %p56 = scmp.ne.s32.totalorder %s47, %s48
      %p57 = scmp.eq.s32.totalorder %s16, 0
      %p58 = por %p56, %p57
      %p59 = scmp.ne.s32.totalorder %s47, %s48
      %p60 = scmp.eq.s32.totalorder %s17, 3
      %p61 = por %p59, %p60
      %p63 = scmp.ne.s32.totalorder %s48, %s62
      %p64 = scmp.eq.s32.totalorder %s17, 0
      %p65 = por %p63, %p64
      %s66 = ssub.s32 %s11, %s18
      %p67 = scmp.eq.s32.totalorder %s66, 0
      %s69 = sadd.s32 %s68, 1
      %s70 = scalar_select %p67, %s68, %s69
      %p73 = pneg %p67
      %p74 = scmp.eq.s32.totalorder %s11, 3
      %p75 = por %p73, %p74
      %p76 = scmp.ne.s32.totalorder %s68, %s71
      %p77 = scmp.eq.s32.totalorder %s11, 0
      %p78 = por %p76, %p77
      %p79 = scmp.ne.s32.totalorder %s68, %s71
      %p80 = scmp.eq.s32.totalorder %s16, 3
      %p81 = por %p79, %p80
      %p82 = scmp.ne.s32.totalorder %s71, %s72
      %p83 = scmp.eq.s32.totalorder %s16, 0
      %p84 = por %p82, %p83
      %p85 = scmp.ne.s32.totalorder %s71, %s72
      %p86 = scmp.eq.s32.totalorder %s17, 3
      %p87 = por %p85, %p86
      %p89 = scmp.ne.s32.totalorder %s72, %s88
      %p90 = scmp.eq.s32.totalorder %s17, 0
      %p91 = por %p89, %p90
      %p92 = scmp.le.s32.totalorder 1, %s11
      %p93 = scmp.lt.s32.totalorder %s11, 5
      %p94 = pnand %p92, %p93
      %p95 = pneg %p94
      // Predicated region
      $region9: #{tpu_custom_call.1} parent=5 // pred_check
        _
      $region10: #{tpu_custom_call.1} parent=5 // pred_check_branch
        %97 = sbr.rel (%p94) target = $region12
      $region11: #{tpu_custom_call.1} parent=5 // pred_region
        %s98 = ssub.s32 %s11, 1
        // Predicated region
        $region13: #{tpu_custom_call.1} parent=11 // pred_check
          %p99 = pneg %p58
        $region14: #{tpu_custom_call.1} parent=11 // pred_check_branch
          %101 = sbr.rel (%p99) target = $region16
        $region15: #{tpu_custom_call.1} parent=11 // pred_region
          _
        $region16: #{tpu_custom_call.1} parent=11 // pred_fallthru
          _
      $region12: #{tpu_custom_call.1} parent=5 // pred_fallthru
        _
      %p102 = scmp.lt.s32.totalorder %s11, 4
      // Predicated region
      $region17: #{tpu_custom_call.1} parent=5 // pred_check
        %p103 = pneg %p102
      $region18: #{tpu_custom_call.1} parent=5 // pred_check_branch
        %105 = sbr.rel (%p103) target = $region20
      $region19: #{tpu_custom_call.1} parent=5 // pred_region
        // Predicated region
        $region21: #{tpu_custom_call.1} parent=19 // pred_check
          %p106 = pneg %p31
        $region22: #{tpu_custom_call.1} parent=19 // pred_check_branch
          %108 = sbr.rel (%p106) target = $region24
        $region23: #{tpu_custom_call.1} parent=19 // pred_region
          %p109 = scmp.lt.s32.totalorder %s11, 3
          %s110 = scalar_select %p109, %s11, 3
          %s111 = smul.addr %s110, 8
          %s112 = scalar_lea.vmem %s0, %s111
        $region24: #{tpu_custom_call.1} parent=19 // pred_fallthru
          _
      $region20: #{tpu_custom_call.1} parent=5 // pred_fallthru
        _
      %p113 = scmp.le.s32.totalorder 1, %s11
      %p114 = scmp.lt.s32.totalorder %s11, 5
      %p115 = pnand %p113, %p114
      %p116 = pneg %p115
      // Predicated region
      $region25: #{tpu_custom_call.1} parent=5 // pred_check
        _
      $region26: #{tpu_custom_call.1} parent=5 // pred_check_branch
        %118 = sbr.rel (%p115) target = $region28
      $region27: #{tpu_custom_call.1} parent=5 // pred_region
        %s119 = ssub.s32 %s11, 1
        %p120 = scmp.lt.s32.totalorder %s16, 3
        %s121 = scalar_select %p120, %s16, 3
        %s122 = smul.addr %s121, 8
        %s123 = scalar_lea.vmem %s0, %s122
        %p124 = pneg %p37
        %p125 = pneg %p34
        %p126 = pneg %p58
        %p127 = pneg %p55
        %p128 = pneg %p84
        %p129 = pneg %p81
        %s130 = sand.u32 %s71, 1
        %s131 = scalar_lea.sflag [#allocation3], %s130
        %s132 = sand.u32 %s71, 1
        %s133 = smul.addr %s132, 8
        %s134 = scalar_lea.vmem [#allocation2], %s133
        %p135 = scmp.lt.s32.totalorder %s16, 3
        %s136 = scalar_select %p135, %s16, 3
        %s137 = smul.addr %s136, 8
        %s138 = scalar_lea.vmem %s0, %s137
        %v139 = vld [vmem:[%s138] sm:$0xff]
        %v140 = vld [vmem:[%s1] sm:$0xff]
        %v141 = vld [vmem:[%s1 + $0x8] sm:$0xff]
        %v142 = vld [vmem:[%s1 + $0x10] sm:$0xff]
        %v143 = vld [vmem:[%s1 + $0x18] sm:$0xff]
        %v144 = vld [vmem:[%s1 + $0x20] sm:$0xff]
        %v145 = vld [vmem:[%s1 + $0x28] sm:$0xff]
        %v146 = vld [vmem:[%s1 + $0x30] sm:$0xff]
        %v147 = vld [vmem:[%s1 + $0x38] sm:$0xff]
        %v148 = vld [vmem:[%s1 + $0x40] sm:$0xff]
        %v149 = vld [vmem:[%s1 + $0x48] sm:$0xff]
        %v150 = vld [vmem:[%s1 + $0x50] sm:$0xff]
        %v151 = vld [vmem:[%s1 + $0x58] sm:$0xff]
        %v152 = vld [vmem:[%s1 + $0x60] sm:$0xff]
        %v153 = vld [vmem:[%s1 + $0x68] sm:$0xff]
        %v154 = vld [vmem:[%s1 + $0x70] sm:$0xff]
        %v155 = vld [vmem:[%s1 + $0x78] sm:$0xff]
        %v156 = vmul.f32 %v139, %v139
        %157 = vadd.xlane.f32.xlu0 %v156
        %v158 = vpop.xlane.xlu0 %157
        %v159 = vmax.f32 %v158, 1e-24
        %v160 = vrsqrt.pop %v159
        %v161 = vmul.f32 %v160, 10.0
        %v162 = vmul.f32 %v139, %v161
        %163 = vmatprep.subr.mxu0 0.0
        %164 = vmatpush1.msra.mxu0 %v140
        %165 = vmatprep.subr.mxu0 0.0
        %166 = vmatpush1.msra.mxu0 %v141
        %167 = vmatprep.subr.mxu0 0.0
        %168 = vmatpush1.msra.mxu0 %v142
        %169 = vmatprep.subr.mxu0 0.0
        %170 = vmatpush1.msra.mxu0 %v143
        %171 = vmatprep.subr.mxu0 0.0
        %172 = vmatpush1.msra.mxu0 %v144
        %173 = vmatprep.subr.mxu0 0.0
        %174 = vmatpush1.msra.mxu0 %v145
        %175 = vmatprep.subr.mxu0 0.0
        %176 = vmatpush1.msra.mxu0 %v146
        %177 = vmatprep.subr.mxu0 0.0
        %178 = vmatpush1.msra.mxu0 %v147
        %179 = vmatprep.subr.mxu0 0.0
        %180 = vmatpush1.msra.mxu0 %v148
        %181 = vmatprep.subr.mxu0 0.0
        %182 = vmatpush1.msra.mxu0 %v149
        %183 = vmatprep.subr.mxu0 0.0
        %184 = vmatpush1.msra.mxu0 %v150
        %185 = vmatprep.subr.mxu0 0.0
        %186 = vmatpush1.msra.mxu0 %v151
        %187 = vmatprep.subr.mxu0 0.0
        %188 = vmatpush1.msra.mxu0 %v152
        %189 = vmatprep.subr.mxu0 0.0
        %190 = vmatpush1.msra.mxu0 %v153
        %191 = vmatprep.subr.mxu0 0.0
        %192 = vmatpush1.msra.mxu0 %v154
        %193 = vmatprep.subr.mxu0 0.0
        %194 = vmatpush1.msra.mxu0 %v155
        %195 = vmatprep.subr.mxu0 0.0
        %196 = vmatpush1.msra.mxu0 0.0
        %197 = vmatprep.subr.mxu0 0.0
        %198 = vmatpush1.msra.mxu0 0.0
        %199 = vmatprep.subr.mxu0 0.0
        %200 = vmatpush1.msra.mxu0 0.0
        %201 = vmatprep.subr.mxu0 0.0
        %202 = vmatpush1.msra.mxu0 0.0
        %203 = vmatprep.subr.mxu0 0.0
        %204 = vmatpush1.msra.mxu0 0.0
        %205 = vmatprep.subr.mxu0 0.0
        %206 = vmatpush1.msra.mxu0 0.0
        %207 = vmatprep.subr.mxu0 0.0
        %208 = vmatpush1.msra.mxu0 0.0
        %209 = vmatprep.subr.mxu0 0.0
        %210 = vmatpush1.msra.mxu0 0.0
        %211 = vmatprep.subr.mxu0 0.0
        %212 = vmatpush1.msra.mxu0 0.0
        %213 = vmatprep.subr.mxu0 0.0
        %214 = vmatpush1.msra.mxu0 0.0
        %215 = vmatprep.subr.mxu0 0.0
        %216 = vmatpush1.msra.mxu0 0.0
        %217 = vmatprep.subr.mxu0 0.0
        %218 = vmatpush1.msra.mxu0 0.0
        %219 = vmatprep.subr.mxu0 0.0
        %220 = vmatpush1.msra.mxu0 0.0
        %221 = vmatprep.subr.mxu0 0.0
        %222 = vmatpush1.msra.mxu0 0.0
        %223 = vmatprep.subr.mxu0 0.0
        %224 = vmatpush1.msra.mxu0 0.0
        %225 = vmatprep.subr.mxu0 0.0
        %226 = vmatpush1.msra.mxu0 0.0
        %227 = vmatprep.mubr.f32.mxu0 0.0
        %228 = vmatmul.mubr.f32.gmra.mrb[0].mxu0 %v162
        %v229 = vpop.f32.mrb[0].mxu0
        %v230 = vadd.f32 0.0, %v229
        %v231 = vpop.f32.mrb[0].mxu0
        %232 = vdwg.mxu0
        %v233 = vlaneseq
        %v234 = vshrl.u32 %v233, 7
        %s235 = smul.u32 %s16, 8
        %v236 = vstv %s235
        %v237 = vadd.s32 %v234, %v236
        %v238 = vlaneseq
        %v239 = vand.u32 %v238, 127
        %v240 = vmul.u32 %v239, 4
        %vm241 = vcmp.ge.s32.totalorder %v237, %v240
        %v242 = vadd.s32 %v239, 1
        %v243 = vmul.u32 %v242, 4
        %vm244 = vcmp.lt.s32.totalorder %v237, %v243
        %vm245 = vmand %vm241, %vm244
        %v246 = vsel %vm245, %v230, 0.0
        %vm247 = vcmask 64512
        %v248 = vsel %vm247, %v246, 0.0
        %249 = vadd.xlane.f32.xlu0 %v248
        %v250 = vpop.xlane.xlu0 %249
        %v251 = vsel %vm245, -1e+30, %v230
        %v252 = vsel %vm247, %v251, -inf
        %253 = vmax.xlane.f32.xlu0 %v252
        %v254 = vpop.xlane.xlu0 %253
        %v255 = vsel %vm247, %v230, 0.0
        %256 = vadd.xlane.f32.xlu0 %v255
        %v257 = vpop.xlane.xlu0 %256
        %v258 = vmax.f32 %v254, %v250
        %v259 = vsub.f32 %v230, %v258
        %v260 = vmul.f32 %v259, 1.442695
        %v261 = vpow.pop %v260
        %v262 = vsel %vm247, %v261, 0.0
        %263 = vadd.xlane.f32.xlu0 %v262
        %v264 = vpop.xlane.xlu0 %263
        %v265 = vlog2.pop %v264
        %v266 = vmul.f32 %v265, 0.6931472
        %v267 = vadd.f32 %v258, %v266
        %vm268 = vcmp.lt.s32.totalorder %v237, 32
        %v269 = vsel %vm268, 1, 0
        %v270 = vcvt.s32.f32 %v269
        %v271 = vmul.f32 %v270, %v267
        %vm272 = vcmask 7168
        %v273 = vsel %vm272, %v271, 0.0
        %274 = vadd.xlane.f32.xlu0 %v273
        %v275 = vpop.xlane.xlu0 %274
        %v276 = vrot.slane %v275, 4
        %v277 = vadd.f32 %v275, %v276
        %v278 = vrot.slane %v277, 2
        %v279 = vadd.f32 %v277, %v278
        %v280 = vrot.slane %v279, 1
        %v281 = vadd.f32 %v279, %v280
        %s282 = vtos %v281
        %v283 = vmul.f32 %v270, %v250
        %v284 = vsel %vm272, %v283, 0.0
        %285 = vadd.xlane.f32.xlu0 %v284
        %v286 = vpop.xlane.xlu0 %285
        %v287 = vrot.slane %v286, 4
        %v288 = vadd.f32 %v286, %v287
        %v289 = vrot.slane %v288, 2
        %v290 = vadd.f32 %v288, %v289
        %v291 = vrot.slane %v290, 1
        %v292 = vadd.f32 %v290, %v291
        %s293 = vtos %v292
        %v294 = vmul.f32 %v270, %v257
        %v295 = vsel %vm272, %v294, 0.0
        %296 = vadd.xlane.f32.xlu0 %v295
        %v297 = vpop.xlane.xlu0 %296
        %v298 = vrot.slane %v297, 4
        %v299 = vadd.f32 %v297, %v298
        %v300 = vrot.slane %v299, 2
        %v301 = vadd.f32 %v299, %v300
        %v302 = vrot.slane %v301, 1
        %v303 = vadd.f32 %v301, %v302
        %s304 = vtos %v303
        %vm305 = vcmp.ge.f32.partialorder %v250, %v254
        %v306 = vsel %vm305, 1, 0
        %v307 = vcvt.s32.f32 %v306
        %v308 = vmul.f32 %v270, %v307
        %v309 = vsel %vm272, %v308, 0.0
        %310 = vadd.xlane.f32.xlu0 %v309
        %v311 = vpop.xlane.xlu0 %310
        %v312 = vrot.slane %v311, 4
        %v313 = vadd.f32 %v311, %v312
        %v314 = vrot.slane %v313, 2
        %v315 = vadd.f32 %v313, %v314
        %v316 = vrot.slane %v315, 1
        %v317 = vadd.f32 %v315, %v316
        %s318 = vtos %v317
        %vm319 = vcmp.eq.s32.totalorder %v239, 0
        %vm320 = vcmp.eq.s32.totalorder %v239, 1
        %vm321 = vcmp.eq.s32.totalorder %v239, 2
        %vm322 = vcmp.eq.s32.totalorder %v239, 3
        %v323 = vstv %s318
        %v324 = vsel %vm322, %v323, 0.0
        %v325 = vstv %s304
        %v326 = vsel %vm321, %v325, %v324
        %v327 = vstv %s293
        %v328 = vsel %vm320, %v327, %v326
        %v329 = vstv %s282
        %v330 = vsel %vm319, %v329, %v328
        %331 = vst [vmem:[%s134] sm:$0xff] %v330
        %s332 = sand.u32 %s71, 1
        %s333 = scalar_lea.sflag [#allocation3], %s332
        %s334 = sand.u32 %s71, 1
        %s335 = smul.addr %s334, 8
        %s336 = scalar_lea.vmem [#allocation2], %s335
        // Predicated region
        $region29: #{tpu_custom_call.1} parent=27 // pred_check
          %p337 = pneg %p81
        $region30: #{tpu_custom_call.1} parent=27 // pred_check_branch
          %339 = sbr.rel (%p337) target = $region32
        $region31: #{tpu_custom_call.1} parent=27 // pred_region
          %s341 = ssub.s32 128, 128
          %342 = vsyncadd %s333, %s341
          %s343 = smul.addr %s16, 128
          %s344 = scalar_lea.hbm %s2, %s343
          %s346 = sshll.u32 %s336, 4
          %s347 = int_to_ptr.vmem [resolvable:$true] %s346
          %349 = dma.vmem_to_hbm [thread:$0]  %s347, 128, %s344, %s333
        $region32: #{tpu_custom_call.1} parent=27 // pred_fallthru
          _
      $region28: #{tpu_custom_call.1} parent=5 // pred_fallthru
        _
      %p350 = scmp.le.s32.totalorder 2, %s11
      // Predicated region
      $region33: #{tpu_custom_call.1} parent=5 // pred_check
        %p351 = pneg %p350
      $region34: #{tpu_custom_call.1} parent=5 // pred_check_branch
        %353 = sbr.rel (%p351) target = $region36
      $region35: #{tpu_custom_call.1} parent=5 // pred_region
        %s354 = ssub.s32 %s11, 2
        // Predicated region
        $region37: #{tpu_custom_call.1} parent=35 // pred_check
          %p355 = pneg %p87
        $region38: #{tpu_custom_call.1} parent=35 // pred_check_branch
          %357 = sbr.rel (%p355) target = $region40
        $region39: #{tpu_custom_call.1} parent=35 // pred_region
          %s358 = sand.u32 %s72, 1
          %s359 = scalar_lea.sflag [#allocation3], %s358
          %s360 = sand.u32 %s72, 1
          %s361 = smul.addr %s360, 8
          %s362 = scalar_lea.vmem [#allocation2], %s361
          %363 = dma.done %s359, 128
        $region40: #{tpu_custom_call.1} parent=35 // pred_fallthru
          _
      $region36: #{tpu_custom_call.1} parent=5 // pred_fallthru
        _
    $region6: #{tpu_custom_call.1} parent=1 // loop_footer
      %s15 = sadd.s32 1, %s11
    $region7: #{tpu_custom_call.1} parent=1 // loop_footer_branch
      %10 = sbr.rel target = $region3
    $region8: #{tpu_custom_call.1} parent=1 // loop_exit
      _
    %364 = vsyncpa [#allocation3], 1
    %s365 = scalar_lea.sflag [#allocation3], 1
    %366 = vsyncpa %s365, 1

</llo_original>
